<compile_context>
chip_gen: v7x
topology: tpu7x:2x2x1
jax: 0.10.0
libtpu: 0.0.40
codegen_flags: <defaults>
</compile_context>

<pallas_src>
import jax
import jax.numpy as jnp
from jax.experimental import pallas as pl
from jax.experimental.pallas import tpu as pltpu

STATE_DIM = 3
ACTION_DIM = 3
HIDDEN = 128
OUT_DIM = ACTION_DIM * 2       # 6
K_AUG = STATE_DIM + 1          # 4: [x ; 1] so b1 rides the MXU for free

DEFAULT_TB = 8192              # batch-tile (lane axis); multiple of 256
SMALL_BATCH_THRESHOLD = 512    # below this, plain XLA matmuls beat a launch


def _qnet_kernel(xa_ref, w1a_ref, w2t_ref, b2t_ref, oT_ref):
    # xa_ref:  (K_AUG, TB)        [x^T ; ones]   (mxu dtype) — batch on lanes
    # w1a_ref: (HIDDEN, K_AUG)    [w1^T | b1]    (mxu dtype) — VMEM-resident
    # w2t_ref: (OUT_DIM, HIDDEN)                 (mxu dtype) — VMEM-resident
    # b2t_ref: (OUT_DIM, 1)                      f32
    # oT_ref:  (OUT_DIM, TB)                     f32, lane-dense
    # fc1 (+b1) on the MXU, accumulate in f32.
    h = jnp.dot(w1a_ref[...], xa_ref[...], preferred_element_type=jnp.float32)
    h = jnp.maximum(h, 0.0)                      # ReLU in f32 on the VPU
    h = h.astype(w2t_ref.dtype)                  # bf16 feed halves vld traffic
    # fc2 on the MXU; b2 add is only 6 sublanes, keep it on the VPU.
    y = jnp.dot(w2t_ref[...], h, preferred_element_type=jnp.float32)
    oT_ref[...] = y + b2t_ref[...]


def _pick_tile(batch, tb_max=DEFAULT_TB):
    """Batch tile: multiple of 256, amortizes ~0.35us/step overhead, and an
    even number of grid steps when the padded batch is small (v7x megacore)."""
    tb_max = max(256, (int(tb_max) // 256) * 256)
    b256 = pl.cdiv(batch, 256) * 256
    n = pl.cdiv(b256, tb_max)
    if n == 1 and b256 > 256:
        n = 2                                   # feed both v7x TensorCores
    tb = pl.cdiv(b256, n * 256) * 256
    return tb, n, n * tb


def _prep_params(w1, b1, w2, b2, mxu_dtype):
    # w1: (STATE_DIM, HIDDEN), b1: (1, HIDDEN), w2: (HIDDEN, OUT_DIM), b2: (1, OUT_DIM)
    w1a = jnp.concatenate(
        [jnp.transpose(w1), jnp.reshape(b1, (HIDDEN, 1))], axis=1)   # (HIDDEN, 4)
    w2t = jnp.transpose(w2)                                          # (OUT_DIM, HIDDEN)
    b2t = jnp.reshape(b2, (OUT_DIM, 1)).astype(jnp.float32)
    return w1a.astype(mxu_dtype), w2t.astype(mxu_dtype), b2t


def qnetwork_forward_t(xT, w1, b1, w2, b2, *, tb_max=DEFAULT_TB,
                       mxu_dtype=jnp.bfloat16):
    """Transpose-free entry: xT (STATE_DIM, B) f32 -> y^T (OUT_DIM, B) f32.

    Keeps batch on the 128-lane axis end-to-end (no wrapper transposes)."""
    B = xT.shape[1]
    tb, n_tiles, b_pad = _pick_tile(B, tb_max)

    w1a, w2t, b2t = _prep_params(w1, b1, w2, b2, mxu_dtype)

    # Augment with a ones row (folds b1 into the fc1 matmul) and pad the batch
    # to a whole number of tiles; padded columns are sliced off afterwards.
    xa = jnp.concatenate([xT, jnp.ones((1, B), xT.dtype)], axis=0)   # (K_AUG, B)
    if b_pad != B:
        xa = jnp.pad(xa, ((0, 0), (0, b_pad - B)))
    xa = xa.astype(mxu_dtype)

    itemsize = jnp.dtype(mxu_dtype).itemsize
    cost = pl.CostEstimate(
        flops=2 * b_pad * (K_AUG * HIDDEN + HIDDEN * OUT_DIM),
        transcendentals=0,
        bytes_accessed=(itemsize * (b_pad * K_AUG + HIDDEN * K_AUG
                                    + HIDDEN * OUT_DIM)
                        + 4 * (b_pad * OUT_DIM + OUT_DIM)),
    )

    # Raise the scoped VMEM limit only if a very large tile needs it (v5e's
    # default scoped limit is 16 MiB).
    vmem_est = ((4 + itemsize) * HIDDEN * tb            # h (f32) + bf16 feed
                + 2 * (K_AUG * tb * itemsize + OUT_DIM * tb * 4)  # dbl-buffered IO
                + (1 << 20))                             # headroom
    vmem_limit = None
    if vmem_est > (14 << 20):
        vmem_limit = min(2 * vmem_est, 100 << 20)

    yT = pl.pallas_call(
        _qnet_kernel,
        out_shape=jax.ShapeDtypeStruct((OUT_DIM, b_pad), jnp.float32),
        grid=(n_tiles,),
        in_specs=[
            pl.BlockSpec((K_AUG, tb), lambda i: (0, i)),        # x tile moves
            pl.BlockSpec((HIDDEN, K_AUG), lambda i: (0, 0)),    # weights resident
            pl.BlockSpec((OUT_DIM, HIDDEN), lambda i: (0, 0)),
            pl.BlockSpec((OUT_DIM, 1), lambda i: (0, 0)),
        ],
        out_specs=pl.BlockSpec((OUT_DIM, tb), lambda i: (0, i)),  # lane-dense out
        compiler_params=pltpu.CompilerParams(
            dimension_semantics=("parallel",),
            vmem_limit_bytes=vmem_limit),
        cost_estimate=cost,
    )(xa, w1a, w2t, b2t)

    return yT[:, :B]


def qnetwork_forward(x, w1, b1, w2, b2, *, tb_max=DEFAULT_TB,
                     mxu_dtype=jnp.bfloat16, force_pallas=False):
    """PyTorch-layout wrapper: x (B, STATE_DIM) f32 -> (B, OUT_DIM) f32."""
    B = x.shape[0]
    if B < SMALL_BATCH_THRESHOLD and not force_pallas:
        # Small-batch fast path: launch overhead dominates, keep it in XLA.
        h = jnp.maximum(x @ w1 + b1, 0.0)
        return h @ w2 + b2
    yT = qnetwork_forward_t(jnp.transpose(x), w1, b1, w2, b2,
                            tb_max=tb_max, mxu_dtype=mxu_dtype)
    return jnp.transpose(yT)


def init_params(key):
    """Deterministic synthetic init (uniform, roughly PyTorch-Linear-like bounds)."""
    k1, k2, k3, k4 = jax.random.split(key, 4)
    bound1 = 1.0 / (STATE_DIM ** 0.5)
    bound2 = 1.0 / (HIDDEN ** 0.5)
    w1 = jax.random.uniform(k1, (STATE_DIM, HIDDEN), jnp.float32, -bound1, bound1)
    b1 = jax.random.uniform(k2, (1, HIDDEN), jnp.float32, -bound1, bound1)
    w2 = jax.random.uniform(k3, (HIDDEN, OUT_DIM), jnp.float32, -bound2, bound2)
    b2 = jax.random.uniform(k4, (1, OUT_DIM), jnp.float32, -bound2, bound2)
    return w1, b1, w2, b2


def reference_forward(x, w1, b1, w2, b2):
    h = jnp.maximum(x @ w1 + b1, 0.0)
    return h @ w2 + b2


if __name__ == "__main__":
    key = jax.random.PRNGKey(0)
    kx, kx2, kp = jax.random.split(key, 3)
    w1, b1, w2, b2 = init_params(kp)

    # (a) Tiny batch matching the module's usage; force the Pallas path.
    #     Exact-f32 mode first (tight tolerance)...
    B = 2
    x = jax.random.normal(kx, (B, STATE_DIM), dtype=jnp.float32)
    ref = reference_forward(x, w1, b1, w2, b2)
    out_f32 = jax.block_until_ready(
        qnetwork_forward(x, w1, b1, w2, b2, mxu_dtype=jnp.float32,
                         force_pallas=True))
    assert out_f32.shape == (B, OUT_DIM), out_f32.shape
    assert jnp.allclose(out_f32, ref, atol=1e-5, rtol=1e-5), "f32 mismatch (B=2)"

    #     ...then the default bf16-MXU-operand mode (looser tolerance).
    out_bf16 = jax.block_until_ready(
        qnetwork_forward(x, w1, b1, w2, b2, force_pallas=True))
    assert jnp.allclose(out_bf16, ref, atol=5e-2, rtol=5e-2), "bf16 mismatch (B=2)"

    # (b) Larger ragged batch: exercises the even 2-tile split (tb=256) and
    #     the padding path.
    B2 = 300
    x2 = jax.random.normal(kx2, (B2, STATE_DIM), dtype=jnp.float32)
    out2 = jax.block_until_ready(
        qnetwork_forward(x2, w1, b1, w2, b2, force_pallas=True))
    ref2 = reference_forward(x2, w1, b1, w2, b2)
    assert out2.shape == (B2, OUT_DIM), out2.shape
    assert jnp.allclose(out2, ref2, atol=5e-2, rtol=5e-2), "mismatch (B=300)"

    # (c) Small-batch fast path (no Pallas launch) keeps exact semantics.
    out_fast = jax.block_until_ready(qnetwork_forward(x, w1, b1, w2, b2))
    assert jnp.allclose(out_fast, ref, atol=1e-5, rtol=1e-5), "fast-path mismatch"

    print("KERNEL_OK")
</pallas_src>

<mosaic_0001>
module attributes {stable_mosaic.version = 11 : i64} {
  func.func @_qnet_kernel(%arg0: i32, %arg1: memref<4x256xf32, #tpu.memory_space<vmem>>, %arg2: memref<128x4xf32, #tpu.memory_space<vmem>>, %arg3: memref<6x128xf32, #tpu.memory_space<vmem>>, %arg4: memref<6x1xf32, #tpu.memory_space<vmem>>, %arg5: memref<6x256xf32, #tpu.memory_space<vmem>>) attributes {dimension_semantics = [#tpu.dimension_semantics<parallel>], iteration_bounds = array<i64: 1>, scalar_prefetch = 0 : i64, scratch_operands = 0 : i64, tpu.core_type = #tpu.core_type<tc>, window_params = [{transform_indices = @transform_0, window_bounds = array<i64: 4, 256>}, {pipeline_mode = #tpu.pipeline_mode<synchronous>, transform_indices = @transform_1, window_bounds = array<i64: 128, 4>}, {pipeline_mode = #tpu.pipeline_mode<synchronous>, transform_indices = @transform_2, window_bounds = array<i64: 6, 128>}, {pipeline_mode = #tpu.pipeline_mode<synchronous>, transform_indices = @transform_3, window_bounds = array<i64: 6, 1>}, {transform_indices = @transform_4, window_bounds = array<i64: 6, 256>}]} {
    %c0 = arith.constant 0 : index
    %c0_0 = arith.constant 0 : index
    %0 = vector.load %arg2[%c0, %c0_0] : memref<128x4xf32, #tpu.memory_space<vmem>>, vector<128x4xf32>
    %c0_1 = arith.constant 0 : index
    %c0_2 = arith.constant 0 : index
    %1 = vector.load %arg1[%c0_1, %c0_2] : memref<4x256xf32, #tpu.memory_space<vmem>>, vector<4x256xf32>
    %cst = arith.constant dense<0.000000e+00> : vector<128x256xf32>
    %2 = tpu.matmul %0, %1, %cst {dimension_numbers = #tpu.dot_dimension_numbers<[1], [0], [0], [1], [0, 0, 1, 1], [], []>} : vector<128x4xf32>, vector<4x256xf32>, vector<128x256xf32> -> vector<128x256xf32>
    %cst_3 = arith.constant 0.000000e+00 : f32
    %3 = vector.broadcast %cst_3 : f32 to vector<128x256xf32>
    %4 = arith.maximumf %2, %3 : vector<128x256xf32>
    %c0_4 = arith.constant 0 : index
    %c0_5 = arith.constant 0 : index
    %5 = vector.load %arg3[%c0_4, %c0_5] : memref<6x128xf32, #tpu.memory_space<vmem>>, vector<6x128xf32>
    %cst_6 = arith.constant dense<0.000000e+00> : vector<6x256xf32>
    %6 = tpu.matmul %5, %4, %cst_6 {dimension_numbers = #tpu.dot_dimension_numbers<[1], [0], [0], [1], [0, 0, 1, 1], [], []>} : vector<6x128xf32>, vector<128x256xf32>, vector<6x256xf32> -> vector<6x256xf32>
    %c0_7 = arith.constant 0 : index
    %c0_8 = arith.constant 0 : index
    %7 = vector.load %arg4[%c0_7, %c0_8] : memref<6x1xf32, #tpu.memory_space<vmem>>, vector<6x1xf32>
    %8 = vector.broadcast %7 : vector<6x1xf32> to vector<6x256xf32>
    %9 = arith.addf %6, %8 : vector<6x256xf32>
    %c0_9 = arith.constant 0 : index
    %c0_10 = arith.constant 0 : index
    %10 = vector.load %arg5[%c0_9, %c0_10] : memref<6x256xf32, #tpu.memory_space<vmem>>, vector<6x256xf32>
    tpu.vector_store %arg5[%c0_9, %c0_10], %9 {strides = array<i32>} : memref<6x256xf32, #tpu.memory_space<vmem>>, vector<6x256xf32>,
    return
  }
  func.func @transform_0(%arg0: i32) -> (i32, i32) {
    %c0_i32 = arith.constant 0 : i32
    %c0_i32_0 = arith.constant 0 : i32
    return %c0_i32, %arg0 : i32, i32
  }
  func.func @transform_1(%arg0: i32) -> (i32, i32) {
    %c0_i32 = arith.constant 0 : i32
    %c0_i32_0 = arith.constant 0 : i32
    %c0_i32_1 = arith.constant 0 : i32
    return %c0_i32, %c0_i32_0 : i32, i32
  }
  func.func @transform_2(%arg0: i32) -> (i32, i32) {
    %c0_i32 = arith.constant 0 : i32
    %c0_i32_0 = arith.constant 0 : i32
    %c0_i32_1 = arith.constant 0 : i32
    return %c0_i32, %c0_i32_0 : i32, i32
  }
  func.func @transform_3(%arg0: i32) -> (i32, i32) {
    %c0_i32 = arith.constant 0 : i32
    %c0_i32_0 = arith.constant 0 : i32
    %c0_i32_1 = arith.constant 0 : i32
    return %c0_i32, %c0_i32_0 : i32, i32
  }
  func.func @transform_4(%arg0: i32) -> (i32, i32) {
    %c0_i32 = arith.constant 0 : i32
    %c0_i32_0 = arith.constant 0 : i32
    return %c0_i32, %arg0 : i32, i32
  }
}

</mosaic_0001>

<llo_original>
// kernel: tpu_custom_call.1
$region0: #{tpu_custom_call.1}
  #allocation0 [shape = 'u32[]', space=smem, size = 0x4, offset = 0x4, fixed_abs, tag = 'smem constant byte address 0x4 - core index']
  #allocation1 [shape = 'u32[144,128]{1,0:T(1,128)}', space=vmem, size = 0x12000, scoped, tag = 'internal scratch']
  %s0 = inlined_call_operand.vmem [shape: f32[4,256], index: 0, kind: input, shape index: {}]
  %s1 = inlined_call_operand.vmem [shape: f32[128,4], index: 1, kind: input, shape index: {}]
  %s2 = inlined_call_operand.vmem [shape: f32[6,128], index: 2, kind: input, shape index: {}]
  %s3 = inlined_call_operand.vmem [shape: f32[6,1], index: 3, kind: input, shape index: {}]
  %s4 = inlined_call_operand.hbm [shape: f32[6,256], index: 4, kind: output, shape index: {}]
  %s5 = sld [smem:[#allocation0]]
  $region26: #{tpu_custom_call.1} parent=0
    _
  %s7 = ssub.s32 1, %s5
  %s8 = scalar_select 0, %s7, %s5
  $region1: #{tpu_custom_call.1} parent=0
    #allocation2 [shape = 'u8[8192]{0}', space=vmem, size = 0x2000, scoped, tag = 'output window, operand 0, single buffered']
    #allocation3 [shape = 's32[1]{0}', space=sflag, size = 0x4, scoped, tag = 'scoped memory for tpu_custom_call.1']
    %9 = vsyncpa [#allocation3], 0
    // Predicated region
    $region2: #{tpu_custom_call.1} parent=1 // pred_check
      _
    $region3: #{tpu_custom_call.1} parent=1 // pred_check_branch
      %11 = sbr.rel (0) target = $region5
    $region4: #{tpu_custom_call.1} parent=1 // pred_region
      _
    $region5: #{tpu_custom_call.1} parent=1 // pred_fallthru
      _
    // Predicated region
    $region6: #{tpu_custom_call.1} parent=1 // pred_check
      _
    $region7: #{tpu_custom_call.1} parent=1 // pred_check_branch
      %13 = sbr.rel (0) target = $region9
    $region8: #{tpu_custom_call.1} parent=1 // pred_region
      _
    $region9: #{tpu_custom_call.1} parent=1 // pred_fallthru
      _
    // Predicated region
    $region10: #{tpu_custom_call.1} parent=1 // pred_check
      _
    $region11: #{tpu_custom_call.1} parent=1 // pred_check_branch
      %15 = sbr.rel (0) target = $region13
    $region12: #{tpu_custom_call.1} parent=1 // pred_region
      _
    $region13: #{tpu_custom_call.1} parent=1 // pred_fallthru
      _
    // Predicated region
    $region14: #{tpu_custom_call.1} parent=1 // pred_check
      _
    $region15: #{tpu_custom_call.1} parent=1 // pred_check_branch
      %17 = sbr.rel (0) target = $region17
    $region16: #{tpu_custom_call.1} parent=1 // pred_region
      _
    $region17: #{tpu_custom_call.1} parent=1 // pred_fallthru
      _
    %v18 = vld [vmem:[%s1] sm:$0xff]
    %v19 = vld [vmem:[%s1 + $0x8] sm:$0xff]
    %v20 = vld [vmem:[%s1 + $0x10] sm:$0xff]
    %v21 = vld [vmem:[%s1 + $0x18] sm:$0xff]
    %v22 = vld [vmem:[%s1 + $0x20] sm:$0xff]
    %v23 = vld [vmem:[%s1 + $0x28] sm:$0xff]
    %v24 = vld [vmem:[%s1 + $0x30] sm:$0xff]
    %v25 = vld [vmem:[%s1 + $0x38] sm:$0xff]
    %v26 = vld [vmem:[%s1 + $0x40] sm:$0xff]
    %v27 = vld [vmem:[%s1 + $0x48] sm:$0xff]
    %v28 = vld [vmem:[%s1 + $0x50] sm:$0xff]
    %v29 = vld [vmem:[%s1 + $0x58] sm:$0xff]
    %v30 = vld [vmem:[%s1 + $0x60] sm:$0xff]
    %v31 = vld [vmem:[%s1 + $0x68] sm:$0xff]
    %v32 = vld [vmem:[%s1 + $0x70] sm:$0xff]
    %v33 = vld [vmem:[%s1 + $0x78] sm:$0xff]
    %v34 = vld [vmem:[%s0] sm:$0xff]
    %v36 = vcombine.high %v34, %v34
    %vm37 = vcmask 31744
    %v39 = vsel %vm37, %v18, 0
    %v42 = vsel %vm37, %v19, 0
    %v45 = vsel %vm37, %v20, 0
    %v48 = vsel %vm37, %v21, 0
    %v51 = vsel %vm37, %v22, 0
    %v54 = vsel %vm37, %v23, 0
    %v57 = vsel %vm37, %v24, 0
    %v60 = vsel %vm37, %v25, 0
    %v63 = vsel %vm37, %v26, 0
    %v66 = vsel %vm37, %v27, 0
    %v69 = vsel %vm37, %v28, 0
    %v72 = vsel %vm37, %v29, 0
    %v75 = vsel %vm37, %v30, 0
    %v78 = vsel %vm37, %v31, 0
    %v81 = vsel %vm37, %v32, 0
    %v84 = vsel %vm37, %v33, 0
    %vm86 = vcmask 1043456
    %v87 = vsel %vm86, %v34, 0
    %v89 = vsel %vm86, %v36, 0
    %91 = vmatprep.subr.mxu0 %v89
    %92 = vmatpush1.msra.mxu0 %v87
    %93 = vmatprep.subr.mxu0 0.0
    %94 = vmatpush1.msra.mxu0 0.0
    %95 = vmatprep.subr.mxu0 0.0
    %96 = vmatpush1.msra.mxu0 0.0
    %97 = vmatprep.subr.mxu0 0.0
    %98 = vmatpush1.msra.mxu0 0.0
    %99 = vmatprep.subr.mxu0 0.0
    %100 = vmatpush1.msra.mxu0 0.0
    %101 = vmatprep.subr.mxu0 0.0
    %102 = vmatpush1.msra.mxu0 0.0
    %103 = vmatprep.subr.mxu0 0.0
    %104 = vmatpush1.msra.mxu0 0.0
    %105 = vmatprep.subr.mxu0 0.0
    %106 = vmatpush1.msra.mxu0 0.0
    %107 = vmatprep.subr.mxu0 0.0
    %108 = vmatpush1.msra.mxu0 0.0
    %109 = vmatprep.subr.mxu0 0.0
    %110 = vmatpush1.msra.mxu0 0.0
    %111 = vmatprep.subr.mxu0 0.0
    %112 = vmatpush1.msra.mxu0 0.0
    %113 = vmatprep.subr.mxu0 0.0
    %114 = vmatpush1.msra.mxu0 0.0
    %115 = vmatprep.subr.mxu0 0.0
    %116 = vmatpush1.msra.mxu0 0.0
    %117 = vmatprep.subr.mxu0 0.0
    %118 = vmatpush1.msra.mxu0 0.0
    %119 = vmatprep.subr.mxu0 0.0
    %120 = vmatpush1.msra.mxu0 0.0
    %121 = vmatprep.subr.mxu0 0.0
    %122 = vmatpush1.msra.mxu0 0.0
    %123 = vmatprep.subr.mxu0 0.0
    %124 = vmatpush1.msra.mxu0 0.0
    %125 = vmatprep.subr.mxu0 0.0
    %126 = vmatpush1.msra.mxu0 0.0
    %127 = vmatprep.subr.mxu0 0.0
    %128 = vmatpush1.msra.mxu0 0.0
    %129 = vmatprep.subr.mxu0 0.0
    %130 = vmatpush1.msra.mxu0 0.0
    %131 = vmatprep.subr.mxu0 0.0
    %132 = vmatpush1.msra.mxu0 0.0
    %133 = vmatprep.subr.mxu0 0.0
    %134 = vmatpush1.msra.mxu0 0.0
    %135 = vmatprep.subr.mxu0 0.0
    %136 = vmatpush1.msra.mxu0 0.0
    %137 = vmatprep.subr.mxu0 0.0
    %138 = vmatpush1.msra.mxu0 0.0
    %139 = vmatprep.subr.mxu0 0.0
    %140 = vmatpush1.msra.mxu0 0.0
    %141 = vmatprep.subr.mxu0 0.0
    %142 = vmatpush1.msra.mxu0 0.0
    %143 = vmatprep.subr.mxu0 0.0
    %144 = vmatpush1.msra.mxu0 0.0
    %145 = vmatprep.subr.mxu0 0.0
    %146 = vmatpush1.msra.mxu0 0.0
    %147 = vmatprep.subr.mxu0 0.0
    %148 = vmatpush1.msra.mxu0 0.0
    %149 = vmatprep.subr.mxu0 0.0
    %150 = vmatpush1.msra.mxu0 0.0
    %151 = vmatprep.subr.mxu0 0.0
    %152 = vmatpush1.msra.mxu0 0.0
    %153 = vmatprep.subr.mxu0 0.0
    %154 = vmatpush1.msra.mxu0 0.0
    %155 = vmatprep.mubr.f32.mxu0 0.0
    %156 = vmatmul.mubr.f32.gmra.mrb[0].mxu0 %v39
    %v157 = vpop.f32.mrb[0].mxu0
    %v158 = vadd.f32 0.0, %v157
    %v159 = vpop.f32.mrb[0].mxu0
    %v160 = vadd.f32 0.0, %v159
    %161 = vmatprep.mubr.f32.mxu0 0.0
    %162 = vmatmul.mubr.f32.gmra.mrb[0].mxu0 %v42
    %v163 = vpop.f32.mrb[0].mxu0
    %v164 = vadd.f32 0.0, %v163
    %v165 = vpop.f32.mrb[0].mxu0
    %v166 = vadd.f32 0.0, %v165
    %167 = vmatprep.mubr.f32.mxu0 0.0
    %168 = vmatmul.mubr.f32.gmra.mrb[0].mxu0 %v45
    %v169 = vpop.f32.mrb[0].mxu0
    %v170 = vadd.f32 0.0, %v169
    %v171 = vpop.f32.mrb[0].mxu0
    %v172 = vadd.f32 0.0, %v171
    %173 = vmatprep.mubr.f32.mxu0 0.0
    %174 = vmatmul.mubr.f32.gmra.mrb[0].mxu0 %v48
    %v175 = vpop.f32.mrb[0].mxu0
    %v176 = vadd.f32 0.0, %v175
    %v177 = vpop.f32.mrb[0].mxu0
    %v178 = vadd.f32 0.0, %v177
    %179 = vmatprep.mubr.f32.mxu0 0.0
    %180 = vmatmul.mubr.f32.gmra.mrb[0].mxu0 %v51
    %v181 = vpop.f32.mrb[0].mxu0
    %v182 = vadd.f32 0.0, %v181
    %v183 = vpop.f32.mrb[0].mxu0
    %v184 = vadd.f32 0.0, %v183
    %185 = vmatprep.mubr.f32.mxu0 0.0
    %186 = vmatmul.mubr.f32.gmra.mrb[0].mxu0 %v54
    %v187 = vpop.f32.mrb[0].mxu0
    %v188 = vadd.f32 0.0, %v187
    %v189 = vpop.f32.mrb[0].mxu0
    %v190 = vadd.f32 0.0, %v189
    %191 = vmatprep.mubr.f32.mxu0 0.0
    %192 = vmatmul.mubr.f32.gmra.mrb[0].mxu0 %v57
    %v193 = vpop.f32.mrb[0].mxu0
    %v194 = vadd.f32 0.0, %v193
    %v195 = vpop.f32.mrb[0].mxu0
    %v196 = vadd.f32 0.0, %v195
    %197 = vmatprep.mubr.f32.mxu0 0.0
    %198 = vmatmul.mubr.f32.gmra.mrb[0].mxu0 %v60
    %v199 = vpop.f32.mrb[0].mxu0
    %v200 = vadd.f32 0.0, %v199
    %v201 = vpop.f32.mrb[0].mxu0
    %v202 = vadd.f32 0.0, %v201
    %203 = vmatprep.mubr.f32.mxu0 0.0
    %204 = vmatmul.mubr.f32.gmra.mrb[0].mxu0 %v63
    %v205 = vpop.f32.mrb[0].mxu0
    %v206 = vadd.f32 0.0, %v205
    %v207 = vpop.f32.mrb[0].mxu0
    %v208 = vadd.f32 0.0, %v207
    %209 = vmatprep.mubr.f32.mxu0 0.0
    %210 = vmatmul.mubr.f32.gmra.mrb[0].mxu0 %v66
    %v211 = vpop.f32.mrb[0].mxu0
    %v212 = vadd.f32 0.0, %v211
    %v213 = vpop.f32.mrb[0].mxu0
    %v214 = vadd.f32 0.0, %v213
    %215 = vmatprep.mubr.f32.mxu0 0.0
    %216 = vmatmul.mubr.f32.gmra.mrb[0].mxu0 %v69
    %v217 = vpop.f32.mrb[0].mxu0
    %v218 = vadd.f32 0.0, %v217
    %v219 = vpop.f32.mrb[0].mxu0
    %v220 = vadd.f32 0.0, %v219
    %221 = vmatprep.mubr.f32.mxu0 0.0
    %222 = vmatmul.mubr.f32.gmra.mrb[0].mxu0 %v72
    %v223 = vpop.f32.mrb[0].mxu0
    %v224 = vadd.f32 0.0, %v223
    %v225 = vpop.f32.mrb[0].mxu0
    %v226 = vadd.f32 0.0, %v225
    %227 = vmatprep.mubr.f32.mxu0 0.0
    %228 = vmatmul.mubr.f32.gmra.mrb[0].mxu0 %v75
    %v229 = vpop.f32.mrb[0].mxu0
    %v230 = vadd.f32 0.0, %v229
    %v231 = vpop.f32.mrb[0].mxu0
    %v232 = vadd.f32 0.0, %v231
    %233 = vmatprep.mubr.f32.mxu0 0.0
    %234 = vmatmul.mubr.f32.gmra.mrb[0].mxu0 %v78
    %v235 = vpop.f32.mrb[0].mxu0
    %v236 = vadd.f32 0.0, %v235
    %v237 = vpop.f32.mrb[0].mxu0
    %v238 = vadd.f32 0.0, %v237
    %239 = vmatprep.mubr.f32.mxu0 0.0
    %240 = vmatmul.mubr.f32.gmra.mrb[0].mxu0 %v81
    %v241 = vpop.f32.mrb[0].mxu0
    %v242 = vadd.f32 0.0, %v241
    %v243 = vpop.f32.mrb[0].mxu0
    %v244 = vadd.f32 0.0, %v243
    %245 = vmatprep.mubr.f32.mxu0 0.0
    %246 = vmatmul.mubr.f32.gmra.mrb[0].mxu0 %v84
    %v247 = vpop.f32.mrb[0].mxu0
    %v248 = vadd.f32 0.0, %v247
    %v249 = vpop.f32.mrb[0].mxu0
    %v250 = vadd.f32 0.0, %v249
    %251 = vdwg.mxu0
    %v252 = vmax.f32 %v158, 0.0
    %v253 = vmax.f32 %v160, 0.0
    %v254 = vmax.f32 %v164, 0.0
    %v255 = vmax.f32 %v166, 0.0
    %v256 = vmax.f32 %v170, 0.0
    %v257 = vmax.f32 %v172, 0.0
    %v258 = vmax.f32 %v176, 0.0
    %v259 = vmax.f32 %v178, 0.0
    %v260 = vmax.f32 %v182, 0.0
    %v261 = vmax.f32 %v184, 0.0
    %v262 = vmax.f32 %v188, 0.0
    %v263 = vmax.f32 %v190, 0.0
    %v264 = vmax.f32 %v194, 0.0
    %v265 = vmax.f32 %v196, 0.0
    %v266 = vmax.f32 %v200, 0.0
    %v267 = vmax.f32 %v202, 0.0
    %v268 = vmax.f32 %v206, 0.0
    %v269 = vmax.f32 %v208, 0.0
    %v270 = vmax.f32 %v212, 0.0
    %v271 = vmax.f32 %v214, 0.0
    %v272 = vmax.f32 %v218, 0.0
    %v273 = vmax.f32 %v220, 0.0
    %v274 = vmax.f32 %v224, 0.0
    %v275 = vmax.f32 %v226, 0.0
    %v276 = vmax.f32 %v230, 0.0
    %v277 = vmax.f32 %v232, 0.0
    %v278 = vmax.f32 %v236, 0.0
    %v279 = vmax.f32 %v238, 0.0
    %v280 = vmax.f32 %v242, 0.0
    %v281 = vmax.f32 %v244, 0.0
    %v282 = vmax.f32 %v248, 0.0
    %v283 = vmax.f32 %v250, 0.0
    %v284 = vld [vmem:[%s2] sm:$0x3f]
    %v285 = vld [vmem:[%s3] sm:$0x3f]
    %287 = vset.pattern.permute.xlu0 0
    %288 = vperm.xlu0 %287, %v285
    %v289 = vpop.permute.xlu0 %288
    %291 = vmatprep.subr.mxu0 %v253
    %292 = vmatpush1.msra.mxu0 %v252
    %293 = vmatprep.subr.mxu0 %v255
    %294 = vmatpush1.msra.mxu0 %v254
    %295 = vmatprep.subr.mxu0 %v257
    %296 = vmatpush1.msra.mxu0 %v256
    %297 = vmatprep.subr.mxu0 %v259
    %298 = vmatpush1.msra.mxu0 %v258
    %299 = vmatprep.subr.mxu0 %v261
    %300 = vmatpush1.msra.mxu0 %v260
    %301 = vmatprep.subr.mxu0 %v263
    %302 = vmatpush1.msra.mxu0 %v262
    %303 = vmatprep.subr.mxu0 %v265
    %304 = vmatpush1.msra.mxu0 %v264
    %305 = vmatprep.subr.mxu0 %v267
    %306 = vmatpush1.msra.mxu0 %v266
    %307 = vmatprep.subr.mxu0 %v269
    %308 = vmatpush1.msra.mxu0 %v268
    %309 = vmatprep.subr.mxu0 %v271
    %310 = vmatpush1.msra.mxu0 %v270
    %311 = vmatprep.subr.mxu0 %v273
    %312 = vmatpush1.msra.mxu0 %v272
    %313 = vmatprep.subr.mxu0 %v275
    %314 = vmatpush1.msra.mxu0 %v274
    %315 = vmatprep.subr.mxu0 %v277
    %316 = vmatpush1.msra.mxu0 %v276
    %317 = vmatprep.subr.mxu0 %v279
    %318 = vmatpush1.msra.mxu0 %v278
    %319 = vmatprep.subr.mxu0 %v281
    %320 = vmatpush1.msra.mxu0 %v280
    %321 = vmatprep.subr.mxu0 %v283
    %322 = vmatpush1.msra.mxu0 %v282
    %323 = vmatprep.subr.mxu0 0.0
    %324 = vmatpush1.msra.mxu0 0.0
    %325 = vmatprep.subr.mxu0 0.0
    %326 = vmatpush1.msra.mxu0 0.0
    %327 = vmatprep.subr.mxu0 0.0
    %328 = vmatpush1.msra.mxu0 0.0
    %329 = vmatprep.subr.mxu0 0.0
    %330 = vmatpush1.msra.mxu0 0.0
    %331 = vmatprep.subr.mxu0 0.0
    %332 = vmatpush1.msra.mxu0 0.0
    %333 = vmatprep.subr.mxu0 0.0
    %334 = vmatpush1.msra.mxu0 0.0
    %335 = vmatprep.subr.mxu0 0.0
    %336 = vmatpush1.msra.mxu0 0.0
    %337 = vmatprep.subr.mxu0 0.0
    %338 = vmatpush1.msra.mxu0 0.0
    %339 = vmatprep.subr.mxu0 0.0
    %340 = vmatpush1.msra.mxu0 0.0
    %341 = vmatprep.subr.mxu0 0.0
    %342 = vmatpush1.msra.mxu0 0.0
    %343 = vmatprep.subr.mxu0 0.0
    %344 = vmatpush1.msra.mxu0 0.0
    %345 = vmatprep.subr.mxu0 0.0
    %346 = vmatpush1.msra.mxu0 0.0
    %347 = vmatprep.subr.mxu0 0.0
    %348 = vmatpush1.msra.mxu0 0.0
    %349 = vmatprep.subr.mxu0 0.0
    %350 = vmatpush1.msra.mxu0 0.0
    %351 = vmatprep.subr.mxu0 0.0
    %352 = vmatpush1.msra.mxu0 0.0
    %353 = vmatprep.subr.mxu0 0.0
    %354 = vmatpush1.msra.mxu0 0.0
    %355 = vmatprep.mubr.f32.mxu0 0.0
    %356 = vmatmul.mubr.f32.gmra.mrb[0].mxu0 %v284
    %v357 = vpop.f32.mrb[0].mxu0
    %v358 = vadd.f32 %v289, %v357
    %v359 = vpop.f32.mrb[0].mxu0
    %v360 = vadd.f32 %v289, %v359
    %361 = vdwg.mxu0
    %362 = vst [vmem:[#allocation2] sm:$0x3f] %v358
    %363 = vst [vmem:[#allocation2 + $0x8] sm:$0x3f] %v360
    // Predicated region
    $region18: #{tpu_custom_call.1} parent=1 // pred_check
      _
    $region19: #{tpu_custom_call.1} parent=1 // pred_check_branch
      %365 = sbr.rel (0) target = $region21
    $region20: #{tpu_custom_call.1} parent=1 // pred_region
      %s367 = ssub.s32 256, 256
      %368 = vsyncadd [#allocation3], %s367
      %s370 = sshll.u32 [#allocation2], 4
      %s371 = int_to_ptr.vmem [resolvable:$true] %s370
      %373 = dma.vmem_to_hbm [thread:$0]  %s371, 256, %s4, [#allocation3]
    $region21: #{tpu_custom_call.1} parent=1 // pred_fallthru
      _
    // Predicated region
    $region22: #{tpu_custom_call.1} parent=1 // pred_check
      _
    $region23: #{tpu_custom_call.1} parent=1 // pred_check_branch
      %375 = sbr.rel (0) target = $region25
    $region24: #{tpu_custom_call.1} parent=1 // pred_region
      %376 = dma.done [#allocation3], 256
    $region25: #{tpu_custom_call.1} parent=1 // pred_fallthru
      _
    %377 = vsyncpa [#allocation3], 1

</llo_original>
